<compile_context>
chip_gen: v5e
topology: v5e:2x2
jax: 0.10.0
libtpu: 0.0.40
codegen_flags: <defaults>
</compile_context>

<pallas_src>
import functools
import math

import numpy as np
import jax
import jax.numpy as jnp
from jax.experimental import pallas as pl
from jax.experimental.pallas import tpu as pltpu


# ----------------------------------------------------------------------------
# Config (mirrors the PyTorch module's hidden-dim derivation)
# ----------------------------------------------------------------------------
CONFIG = {
    "model": {
        "state_dim": 4,
        "n_experts": 4,
        "expert_architecture": {"width": 32, "depth": 32},   # 4*32*32 = 4096
        "gating_architecture": {"width": 16, "depth": 6},    # 16*6    = 96
    },
    "integration": {
        "rtol": 1e-5,
        "atol": 1e-6,
        "method": "rk4",
        "adjoint": True,
        "dynamics_max_norm": 5.0,
    },
}

NUM_LAYERS = 4
MATMUL_DTYPE = jnp.float32   # TODO(synk): jnp.bfloat16 for ~3x MXU throughput


def derive_hidden_dim(config):
    m = config["model"]
    expert_params = (m["n_experts"] * m["expert_architecture"]["width"]
                     * m["expert_architecture"]["depth"])
    gating_params = (m["gating_architecture"]["width"]
                     * m["gating_architecture"]["depth"])
    total_params = expert_params + gating_params
    return int(math.sqrt(total_params / NUM_LAYERS))


# ----------------------------------------------------------------------------
# Shared in-kernel dynamics (batch-on-lanes):
#   xT is [state_dim, TB]  (batch on the lane axis), t11 is a (1,1) f32 value.
#   Weights keep the PyTorch nn.Linear layout [out, in]; the time features and
#   layer-1 bias are folded in as a per-row column (no concat).
#   vecs columns: 0=w_t, 1=w_sin, 2=w_cos, 3=b1, 4=b2, 5=b3 (6,7 unused).
# ----------------------------------------------------------------------------
def _mlp_dynamics_T(xT, t11, w1x, w2, w3, w4, vecs, b4, max_norm):
    sin_t = jnp.sin(t11)
    cos_t = jnp.cos(t11)
    time_col = (t11 * vecs[:, 0:1] + sin_t * vecs[:, 1:2]
                + cos_t * vecs[:, 2:3] + vecs[:, 3:4])            # [H, 1]

    h = jnp.dot(w1x.astype(MATMUL_DTYPE), xT.astype(MATMUL_DTYPE),
                preferred_element_type=jnp.float32) + time_col
    h = jnp.maximum(h, 0.0)
    h = jnp.dot(w2.astype(MATMUL_DTYPE), h.astype(MATMUL_DTYPE),
                preferred_element_type=jnp.float32) + vecs[:, 4:5]
    h = jnp.maximum(h, 0.0)
    h = jnp.dot(w3.astype(MATMUL_DTYPE), h.astype(MATMUL_DTYPE),
                preferred_element_type=jnp.float32) + vecs[:, 5:6]
    h = jnp.maximum(h, 0.0)
    dx = jnp.dot(w4.astype(MATMUL_DTYPE), h.astype(MATMUL_DTYPE),
                 preferred_element_type=jnp.float32) + b4          # [sd, TB]

    if max_norm > 0.0:
        # Per-batch-column clip (sublane reduce over state_dim rows); columns
        # are independent, so garbage columns of a partial batch tile cannot
        # contaminate valid ones.
        sumsq = jnp.sum(dx * dx, axis=0, keepdims=True)            # [1, TB]
        scale = jnp.minimum(
            1.0, jnp.float32(max_norm) * jax.lax.rsqrt(sumsq + jnp.float32(1e-12)))
        dx = dx * scale
    return dx


# ----------------------------------------------------------------------------
# Kernel 1: single dynamics evaluation  dx/dt = f(t, x)   (module.forward)
# ----------------------------------------------------------------------------
def _forward_kernel(t_ref, x_ref, w1x_ref, w2_ref, w3_ref, w4_ref, vecs_ref,
                    b4_ref, out_ref, *, max_norm):
    t11 = jnp.full((1, 1), t_ref[0], dtype=jnp.float32)
    dx = _mlp_dynamics_T(x_ref[...].astype(jnp.float32), t11,
                         w1x_ref[...], w2_ref[...], w3_ref[...], w4_ref[...],
                         vecs_ref[...], b4_ref[...], max_norm)
    out_ref[...] = dx.astype(out_ref.dtype)


def single_neural_ode_forward(t, x, packed, max_norm, *, batch_tile=4096):
    """Pallas-backed SingleNeuralODE.forward(t, x) -> dx/dt [B, state_dim].

    batch_tile should be a multiple of 128 when B > batch_tile (defaults are).
    """
    B, state_dim = x.shape
    w1x, w2, w3, w4, vecs, b4 = packed
    H = w1x.shape[0]

    t_arr = jnp.asarray(t, dtype=jnp.float32)
    if t_arr.ndim >= 1 and t_arr.size > 1:
        # TODO(synk): per-batch time vectors (t of shape [B] with distinct
        # values) take a pure-JAX fallback; the Pallas fast path covers the
        # scalar-t contract used by the ODE solver.
        return _forward_time_vector_jnp(t_arr.reshape(B, 1), x, packed, max_norm)
    t_smem = t_arr.reshape((1,))

    xT = x.astype(jnp.float32).T                     # [state_dim, B], batch on lanes
    TB = B if B <= batch_tile else batch_tile
    nb = pl.cdiv(B, TB)
    const = lambda i: (0, 0)

    outT = pl.pallas_call(
        functools.partial(_forward_kernel, max_norm=float(max_norm)),
        out_shape=jax.ShapeDtypeStruct((state_dim, B), jnp.float32),
        grid=(nb,),
        in_specs=[
            pl.BlockSpec(memory_space=pltpu.MemorySpace.SMEM),   # t (scalar)
            pl.BlockSpec((state_dim, TB), lambda i: (0, i)),     # x^T (streamed)
            pl.BlockSpec((H, state_dim), const),                 # W1_x  (resident)
            pl.BlockSpec((H, H), const),                         # W2
            pl.BlockSpec((H, H), const),                         # W3
            pl.BlockSpec((state_dim, H), const),                 # W4
            pl.BlockSpec((H, 8), const),                         # w_t/w_sin/w_cos/b1/b2/b3
            pl.BlockSpec((state_dim, 1), const),                 # b4
        ],
        out_specs=pl.BlockSpec((state_dim, TB), lambda i: (0, i)),
        compiler_params=pltpu.CompilerParams(
            dimension_semantics=("parallel",)),
    )(t_smem, xT, w1x, w2, w3, w4, vecs, b4)
    return outT.T                                    # [B, state_dim]


def _forward_time_vector_jnp(t_col, x, packed, max_norm):
    """Pure-JAX fallback for per-batch time vectors (identical math)."""
    w1x, w2, w3, w4, vecs, b4 = packed
    h = (x @ w1x.T + t_col * vecs[:, 0] + jnp.sin(t_col) * vecs[:, 1]
         + jnp.cos(t_col) * vecs[:, 2] + vecs[:, 3])
    h = jnp.maximum(h, 0.0)
    h = jnp.maximum(h @ w2.T + vecs[:, 4], 0.0)
    h = jnp.maximum(h @ w3.T + vecs[:, 5], 0.0)
    dx = h @ w4.T + b4[:, 0]
    if max_norm > 0:
        n = jnp.sqrt(jnp.sum(dx * dx, axis=-1, keepdims=True))
        dx = dx * jnp.minimum(1.0, max_norm / (n + 1e-6))
    return dx


# ----------------------------------------------------------------------------
# Kernel 2: fused fixed-grid RK4 integrate (torchdiffeq method='rk4',
# 3/8-rule step).  grid=(batch_tiles, T): batch axis "parallel" (megacore),
# time axis "arbitrary" (sequential); state carried in a per-tile VMEM scratch
# that is re-initialised at s==0 of every batch tile; weights DMA'd once.
# ----------------------------------------------------------------------------
def _rk4_step_kernel(ts_ref, x0_ref, w1x_ref, w2_ref, w3_ref, w4_ref, vecs_ref,
                     b4_ref, traj_ref, x_carry, *, max_norm):
    s = pl.program_id(1)          # time index (resets per batch tile)
    w1x = w1x_ref[...]
    w2 = w2_ref[...]
    w3 = w3_ref[...]
    w4 = w4_ref[...]
    vecs = vecs_ref[...]
    b4 = b4_ref[...]

    def f(t_scalar, xx):
        t11 = jnp.full((1, 1), t_scalar, dtype=jnp.float32)
        return _mlp_dynamics_T(xx, t11, w1x, w2, w3, w4, vecs, b4, max_norm)

    @pl.when(s == 0)
    def _init():
        x_carry[...] = x0_ref[...].astype(jnp.float32)

    @pl.when(s > 0)
    def _step():
        t0 = ts_ref[s - 1]
        t1 = ts_ref[s]
        dt = t1 - t0
        third = jnp.float32(1.0 / 3.0)
        x = x_carry[...]
        # torchdiffeq 'rk4' = 3/8-rule step.
        k1 = f(t0, x)
        k2 = f(t0 + dt * third, x + dt * third * k1)
        k3 = f(t0 + 2.0 * dt * third, x + dt * (k2 - third * k1))
        k4 = f(t1, x + dt * (k1 - k2 + k3))
        x_carry[...] = x + dt * 0.125 * (k1 + 3.0 * (k2 + k3) + k4)

    traj_ref[...] = x_carry[...].astype(traj_ref.dtype)


def single_neural_ode_integrate_rk4(x0, t_span, packed, max_norm, *,
                                    batch_tile=2048):
    """Fixed-grid RK4 trajectory [T, B, state_dim]; the full solver loop is
    fused into a single Pallas kernel (weights DMA'd to VMEM once), batch
    tiled on a parallel grid axis, state carried batch-on-lanes."""
    B, state_dim = x0.shape
    w1x, w2, w3, w4, vecs, b4 = packed
    H = w1x.shape[0]
    T = int(t_span.shape[0])

    x0T = x0.astype(jnp.float32).T                  # [state_dim, B]
    ts = t_span.astype(jnp.float32)
    TB = B if B <= batch_tile else batch_tile
    nb = pl.cdiv(B, TB)
    const = lambda b, s: (0, 0)

    trajT = pl.pallas_call(
        functools.partial(_rk4_step_kernel, max_norm=float(max_norm)),
        out_shape=jax.ShapeDtypeStruct((T, state_dim, B), jnp.float32),
        grid=(nb, T),
        in_specs=[
            pl.BlockSpec(memory_space=pltpu.MemorySpace.SMEM),    # t_span
            pl.BlockSpec((state_dim, TB), lambda b, s: (0, b)),   # x0^T per tile
            pl.BlockSpec((H, state_dim), const),                  # W1_x (resident)
            pl.BlockSpec((H, H), const),                          # W2
            pl.BlockSpec((H, H), const),                          # W3
            pl.BlockSpec((state_dim, H), const),                  # W4
            pl.BlockSpec((H, 8), const),                          # w_t/w_sin/w_cos/b1/b2/b3
            pl.BlockSpec((state_dim, 1), const),                  # b4
        ],
        out_specs=pl.BlockSpec((None, state_dim, TB), lambda b, s: (s, 0, b)),
        scratch_shapes=[pltpu.VMEM((state_dim, TB), jnp.float32)],  # state carry
        compiler_params=pltpu.CompilerParams(
            dimension_semantics=("parallel", "arbitrary")),
    )(ts, x0T, w1x, w2, w3, w4, vecs, b4)
    return jnp.transpose(trajT, (0, 2, 1))          # [T, B, state_dim]
    # TODO(synk): adaptive-step methods (dopri5/rtol/atol) and the adjoint
    # backward pass of integrate() are not implemented as Pallas kernels.


# ----------------------------------------------------------------------------
# Parameter construction (PyTorch nn.Linear layout) + one-time packing
# ----------------------------------------------------------------------------
def init_params(key, state_dim, hidden_dim):
    """nn.Linear-style params: W [out, in], b [out], torch default init bounds."""
    in_dim = state_dim + 3
    dims = [(hidden_dim, in_dim), (hidden_dim, hidden_dim),
            (hidden_dim, hidden_dim), (state_dim, hidden_dim)]
    params = []
    for (fan_out, fan_in) in dims:
        key, kw, kb = jax.random.split(key, 3)
        bound = 1.0 / math.sqrt(fan_in)
        w = jax.random.uniform(kw, (fan_out, fan_in), jnp.float32, -bound, bound)
        b = jax.random.uniform(kb, (fan_out,), jnp.float32, -bound, bound)
        params.append((w, b))
    return params


def pack_params(params, state_dim):
    """One-time repack for the batch-on-lanes kernels: keep the PyTorch
    [out, in] layout, split W1 into the x-columns + time columns, and
    consolidate the six small vectors into one [H, 8] operand."""
    (W1, B1), (W2, B2), (W3, B3), (W4, B4) = params
    H = W1.shape[0]
    w1x = W1[:, :state_dim]                         # [H, state_dim]
    vecs = jnp.zeros((H, 8), jnp.float32)
    vecs = vecs.at[:, 0].set(W1[:, state_dim])      # w_t
    vecs = vecs.at[:, 1].set(W1[:, state_dim + 1])  # w_sin
    vecs = vecs.at[:, 2].set(W1[:, state_dim + 2])  # w_cos
    vecs = vecs.at[:, 3].set(B1)
    vecs = vecs.at[:, 4].set(B2)
    vecs = vecs.at[:, 5].set(B3)
    b4 = B4[:, None]                                # [state_dim, 1]
    return (w1x, W2, W3, W4, vecs, b4)


# ----------------------------------------------------------------------------
# NumPy float64 references (exact PyTorch math)
# ----------------------------------------------------------------------------
def _np_forward(t_s, x_np, params_np, max_norm):
    (W1, b1), (W2, b2), (W3, b3), (W4, b4) = params_np
    tt = np.full((x_np.shape[0], 1), t_s, dtype=np.float64)
    inp = np.concatenate([x_np, tt, np.sin(tt), np.cos(tt)], axis=-1)
    h = np.maximum(inp @ W1.T + b1, 0.0)
    h = np.maximum(h @ W2.T + b2, 0.0)
    h = np.maximum(h @ W3.T + b3, 0.0)
    dx = h @ W4.T + b4
    if max_norm > 0:
        n = np.sqrt(np.sum(dx * dx, axis=-1, keepdims=True))
        dx = dx * np.minimum(1.0, max_norm / (n + 1e-6))
    return dx


def _np_integrate_rk4(x0_np, ts_np, params_np, max_norm):
    f = lambda tt, yy: _np_forward(tt, yy, params_np, max_norm)
    xs = [x0_np]
    x = x0_np
    for i in range(1, len(ts_np)):
        t0, t1 = ts_np[i - 1], ts_np[i]
        dt = t1 - t0
        k1 = f(t0, x)
        k2 = f(t0 + dt / 3.0, x + dt * k1 / 3.0)
        k3 = f(t0 + 2.0 * dt / 3.0, x + dt * (k2 - k1 / 3.0))
        k4 = f(t1, x + dt * (k1 - k2 + k3))
        x = x + dt * (k1 + 3.0 * (k2 + k3) + k4) / 8.0
        xs.append(x)
    return np.stack(xs)


# ----------------------------------------------------------------------------
if __name__ == "__main__":
    state_dim = CONFIG["model"]["state_dim"]
    hidden_dim = derive_hidden_dim(CONFIG)                      # = 32
    max_norm = float(CONFIG["integration"].get("dynamics_max_norm", 0.0))

    key = jax.random.PRNGKey(0)
    key, kx, kx2 = jax.random.split(key, 3)

    params = init_params(key, state_dim, hidden_dim)
    packed = pack_params(params, state_dim)

    # --- tiny shapes (single tile) --------------------------------------
    B = 2
    x = jax.random.normal(kx, (B, state_dim), dtype=jnp.float32)
    t = jnp.float32(0.5)

    dx_dt = jax.block_until_ready(single_neural_ode_forward(t, x, packed, max_norm))

    T = 8
    t_span = jnp.linspace(0.0, 0.7, T, dtype=jnp.float32)
    traj = jax.block_until_ready(
        single_neural_ode_integrate_rk4(x, t_span, packed, max_norm))

    # --- multi-tile / parallel-batch-axis path --------------------------
    B2 = 384
    x2 = jax.random.normal(kx2, (B2, state_dim), dtype=jnp.float32)
    dx2 = jax.block_until_ready(
        single_neural_ode_forward(t, x2, packed, max_norm, batch_tile=128))
    T2 = 5
    t_span2 = jnp.linspace(0.0, 0.4, T2, dtype=jnp.float32)
    traj2 = jax.block_until_ready(
        single_neural_ode_integrate_rk4(x2, t_span2, packed, max_norm,
                                        batch_tile=128))

    # ---- float64 NumPy reference checks --------------------------------
    params_np = [(np.asarray(w, np.float64), np.asarray(b, np.float64))
                 for (w, b) in params]
    x_np = np.asarray(x, np.float64)
    x2_np = np.asarray(x2, np.float64)
    ts_np = np.asarray(t_span, np.float64)
    ts2_np = np.asarray(t_span2, np.float64)

    assert np.allclose(np.asarray(dx_dt, np.float64),
                       _np_forward(0.5, x_np, params_np, max_norm),
                       rtol=5e-3, atol=5e-3), "forward mismatch vs reference"
    assert np.allclose(np.asarray(traj, np.float64),
                       _np_integrate_rk4(x_np, ts_np, params_np, max_norm),
                       rtol=5e-3, atol=5e-3), "rk4 trajectory mismatch vs reference"
    assert np.allclose(np.asarray(dx2, np.float64),
                       _np_forward(0.5, x2_np, params_np, max_norm),
                       rtol=5e-3, atol=5e-3), "tiled forward mismatch vs reference"
    assert np.allclose(np.asarray(traj2, np.float64),
                       _np_integrate_rk4(x2_np, ts2_np, params_np, max_norm),
                       rtol=5e-3, atol=5e-3), "tiled rk4 mismatch vs reference"

    print("KERNEL_OK")
</pallas_src>

<mosaic_0001>
module attributes {stable_mosaic.version = 11 : i64} {
  func.func @_forward_kernel(%arg0: i32, %arg1: memref<1xf32, #tpu.memory_space<smem>>, %arg2: memref<4x2xf32, #tpu.memory_space<vmem>>, %arg3: memref<32x4xf32, #tpu.memory_space<vmem>>, %arg4: memref<32x32xf32, #tpu.memory_space<vmem>>, %arg5: memref<32x32xf32, #tpu.memory_space<vmem>>, %arg6: memref<4x32xf32, #tpu.memory_space<vmem>>, %arg7: memref<32x8xf32, #tpu.memory_space<vmem>>, %arg8: memref<4x1xf32, #tpu.memory_space<vmem>>, %arg9: memref<4x2xf32, #tpu.memory_space<vmem>>) attributes {dimension_semantics = [#tpu.dimension_semantics<parallel>], iteration_bounds = array<i64: 1>, scalar_prefetch = 0 : i64, scratch_operands = 0 : i64, tpu.core_type = #tpu.core_type<tc>, window_params = [{transform_indices = @transform_0, window_bounds = array<i64: 1>}, {transform_indices = @transform_1, window_bounds = array<i64: 4, 2>}, {pipeline_mode = #tpu.pipeline_mode<synchronous>, transform_indices = @transform_2, window_bounds = array<i64: 32, 4>}, {pipeline_mode = #tpu.pipeline_mode<synchronous>, transform_indices = @transform_3, window_bounds = array<i64: 32, 32>}, {pipeline_mode = #tpu.pipeline_mode<synchronous>, transform_indices = @transform_4, window_bounds = array<i64: 32, 32>}, {pipeline_mode = #tpu.pipeline_mode<synchronous>, transform_indices = @transform_5, window_bounds = array<i64: 4, 32>}, {pipeline_mode = #tpu.pipeline_mode<synchronous>, transform_indices = @transform_6, window_bounds = array<i64: 32, 8>}, {pipeline_mode = #tpu.pipeline_mode<synchronous>, transform_indices = @transform_7, window_bounds = array<i64: 4, 1>}, {transform_indices = @transform_8, window_bounds = array<i64: 4, 2>}]} {
    %c0 = arith.constant 0 : index
    %0 = memref.load %arg1[%c0] : memref<1xf32, #tpu.memory_space<smem>>
    %1 = vector.broadcast %0 : f32 to vector<1x1xf32>
    %c0_0 = arith.constant 0 : index
    %c0_1 = arith.constant 0 : index
    %2 = vector.load %arg2[%c0_0, %c0_1] : memref<4x2xf32, #tpu.memory_space<vmem>>, vector<4x2xf32>
    %c0_2 = arith.constant 0 : index
    %c0_3 = arith.constant 0 : index
    %3 = vector.load %arg3[%c0_2, %c0_3] : memref<32x4xf32, #tpu.memory_space<vmem>>, vector<32x4xf32>
    %c0_4 = arith.constant 0 : index
    %c0_5 = arith.constant 0 : index
    %4 = vector.load %arg4[%c0_4, %c0_5] : memref<32x32xf32, #tpu.memory_space<vmem>>, vector<32x32xf32>
    %c0_6 = arith.constant 0 : index
    %c0_7 = arith.constant 0 : index
    %5 = vector.load %arg5[%c0_6, %c0_7] : memref<32x32xf32, #tpu.memory_space<vmem>>, vector<32x32xf32>
    %c0_8 = arith.constant 0 : index
    %c0_9 = arith.constant 0 : index
    %6 = vector.load %arg6[%c0_8, %c0_9] : memref<4x32xf32, #tpu.memory_space<vmem>>, vector<4x32xf32>
    %c0_10 = arith.constant 0 : index
    %c0_11 = arith.constant 0 : index
    %7 = vector.load %arg7[%c0_10, %c0_11] : memref<32x8xf32, #tpu.memory_space<vmem>>, vector<32x8xf32>
    %c0_12 = arith.constant 0 : index
    %c0_13 = arith.constant 0 : index
    %8 = vector.load %arg8[%c0_12, %c0_13] : memref<4x1xf32, #tpu.memory_space<vmem>>, vector<4x1xf32>
    %9 = math.sin %1 : vector<1x1xf32>
    %10 = math.cos %1 : vector<1x1xf32>
    %11 = vector.extract_strided_slice %7 {offsets = [0, 0], sizes = [32, 1], strides = [1, 1]} : vector<32x8xf32> to vector<32x1xf32>
    %12 = vector.broadcast %1 : vector<1x1xf32> to vector<32x1xf32>
    %13 = arith.mulf %12, %11 : vector<32x1xf32>
    %14 = vector.extract_strided_slice %7 {offsets = [0, 1], sizes = [32, 1], strides = [1, 1]} : vector<32x8xf32> to vector<32x1xf32>
    %15 = vector.broadcast %9 : vector<1x1xf32> to vector<32x1xf32>
    %16 = arith.mulf %15, %14 : vector<32x1xf32>
    %17 = arith.addf %13, %16 : vector<32x1xf32>
    %18 = vector.extract_strided_slice %7 {offsets = [0, 2], sizes = [32, 1], strides = [1, 1]} : vector<32x8xf32> to vector<32x1xf32>
    %19 = vector.broadcast %10 : vector<1x1xf32> to vector<32x1xf32>
    %20 = arith.mulf %19, %18 : vector<32x1xf32>
    %21 = arith.addf %17, %20 : vector<32x1xf32>
    %22 = vector.extract_strided_slice %7 {offsets = [0, 3], sizes = [32, 1], strides = [1, 1]} : vector<32x8xf32> to vector<32x1xf32>
    %23 = arith.addf %21, %22 : vector<32x1xf32>
    %cst = arith.constant dense<0.000000e+00> : vector<32x2xf32>
    %24 = tpu.matmul %3, %2, %cst {dimension_numbers = #tpu.dot_dimension_numbers<[1], [0], [0], [1], [0, 0, 1, 1], [], []>} : vector<32x4xf32>, vector<4x2xf32>, vector<32x2xf32> -> vector<32x2xf32>
    %25 = vector.broadcast %23 : vector<32x1xf32> to vector<32x2xf32>
    %26 = arith.addf %24, %25 : vector<32x2xf32>
    %cst_14 = arith.constant 0.000000e+00 : f32
    %27 = vector.broadcast %cst_14 : f32 to vector<32x2xf32>
    %28 = arith.maximumf %26, %27 : vector<32x2xf32>
    %cst_15 = arith.constant dense<0.000000e+00> : vector<32x2xf32>
    %29 = tpu.matmul %4, %28, %cst_15 {dimension_numbers = #tpu.dot_dimension_numbers<[1], [0], [0], [1], [0, 0, 1, 1], [], []>} : vector<32x32xf32>, vector<32x2xf32>, vector<32x2xf32> -> vector<32x2xf32>
    %30 = vector.extract_strided_slice %7 {offsets = [0, 4], sizes = [32, 1], strides = [1, 1]} : vector<32x8xf32> to vector<32x1xf32>
    %31 = vector.broadcast %30 : vector<32x1xf32> to vector<32x2xf32>
    %32 = arith.addf %29, %31 : vector<32x2xf32>
    %cst_16 = arith.constant 0.000000e+00 : f32
    %33 = vector.broadcast %cst_16 : f32 to vector<32x2xf32>
    %34 = arith.maximumf %32, %33 : vector<32x2xf32>
    %cst_17 = arith.constant dense<0.000000e+00> : vector<32x2xf32>
    %35 = tpu.matmul %5, %34, %cst_17 {dimension_numbers = #tpu.dot_dimension_numbers<[1], [0], [0], [1], [0, 0, 1, 1], [], []>} : vector<32x32xf32>, vector<32x2xf32>, vector<32x2xf32> -> vector<32x2xf32>
    %36 = vector.extract_strided_slice %7 {offsets = [0, 5], sizes = [32, 1], strides = [1, 1]} : vector<32x8xf32> to vector<32x1xf32>
    %37 = vector.broadcast %36 : vector<32x1xf32> to vector<32x2xf32>
    %38 = arith.addf %35, %37 : vector<32x2xf32>
    %cst_18 = arith.constant 0.000000e+00 : f32
    %39 = vector.broadcast %cst_18 : f32 to vector<32x2xf32>
    %40 = arith.maximumf %38, %39 : vector<32x2xf32>
    %cst_19 = arith.constant dense<0.000000e+00> : vector<4x2xf32>
    %41 = tpu.matmul %6, %40, %cst_19 {dimension_numbers = #tpu.dot_dimension_numbers<[1], [0], [0], [1], [0, 0, 1, 1], [], []>} : vector<4x32xf32>, vector<32x2xf32>, vector<4x2xf32> -> vector<4x2xf32>
    %42 = vector.broadcast %8 : vector<4x1xf32> to vector<4x2xf32>
    %43 = arith.addf %41, %42 : vector<4x2xf32>
    %44 = arith.mulf %43, %43 : vector<4x2xf32>
    %cst_20 = arith.constant dense<0.000000e+00> : vector<2xf32>
    %45 = vector.multi_reduction <add>, %44, %cst_20 [0] : vector<4x2xf32> to vector<2xf32>
    %46 = vector.shape_cast %45 : vector<2xf32> to vector<1x2xf32>
    %cst_21 = arith.constant 9.99999996E-13 : f32
    %47 = vector.broadcast %cst_21 : f32 to vector<1x2xf32>
    %48 = arith.addf %46, %47 : vector<1x2xf32>
    %49 = math.rsqrt %48 : vector<1x2xf32>
    %cst_22 = arith.constant 5.000000e+00 : f32
    %50 = vector.broadcast %cst_22 : f32 to vector<1x2xf32>
    %51 = arith.mulf %50, %49 : vector<1x2xf32>
    %cst_23 = arith.constant 1.000000e+00 : f32
    %52 = vector.broadcast %cst_23 : f32 to vector<1x2xf32>
    %53 = arith.minimumf %52, %51 : vector<1x2xf32>
    %54 = vector.broadcast %53 : vector<1x2xf32> to vector<4x2xf32>
    %55 = arith.mulf %43, %54 : vector<4x2xf32>
    %c0_24 = arith.constant 0 : index
    %c0_25 = arith.constant 0 : index
    %56 = vector.load %arg9[%c0_24, %c0_25] : memref<4x2xf32, #tpu.memory_space<vmem>>, vector<4x2xf32>
    tpu.vector_store %arg9[%c0_24, %c0_25], %55 {strides = array<i32>} : memref<4x2xf32, #tpu.memory_space<vmem>>, vector<4x2xf32>,
    return
  }
  func.func @transform_0(%arg0: i32) -> i32 {
    %c0_i32 = arith.constant 0 : i32
    %c0_i32_0 = arith.constant 0 : i32
    return %c0_i32 : i32
  }
  func.func @transform_1(%arg0: i32) -> (i32, i32) {
    %c0_i32 = arith.constant 0 : i32
    %c0_i32_0 = arith.constant 0 : i32
    return %c0_i32, %arg0 : i32, i32
  }
  func.func @transform_2(%arg0: i32) -> (i32, i32) {
    %c0_i32 = arith.constant 0 : i32
    %c0_i32_0 = arith.constant 0 : i32
    %c0_i32_1 = arith.constant 0 : i32
    return %c0_i32, %c0_i32_0 : i32, i32
  }
  func.func @transform_3(%arg0: i32) -> (i32, i32) {
    %c0_i32 = arith.constant 0 : i32
    %c0_i32_0 = arith.constant 0 : i32
    %c0_i32_1 = arith.constant 0 : i32
    return %c0_i32, %c0_i32_0 : i32, i32
  }
  func.func @transform_4(%arg0: i32) -> (i32, i32) {
    %c0_i32 = arith.constant 0 : i32
    %c0_i32_0 = arith.constant 0 : i32
    %c0_i32_1 = arith.constant 0 : i32
    return %c0_i32, %c0_i32_0 : i32, i32
  }
  func.func @transform_5(%arg0: i32) -> (i32, i32) {
    %c0_i32 = arith.constant 0 : i32
    %c0_i32_0 = arith.constant 0 : i32
    %c0_i32_1 = arith.constant 0 : i32
    return %c0_i32, %c0_i32_0 : i32, i32
  }
  func.func @transform_6(%arg0: i32) -> (i32, i32) {
    %c0_i32 = arith.constant 0 : i32
    %c0_i32_0 = arith.constant 0 : i32
    %c0_i32_1 = arith.constant 0 : i32
    return %c0_i32, %c0_i32_0 : i32, i32
  }
  func.func @transform_7(%arg0: i32) -> (i32, i32) {
    %c0_i32 = arith.constant 0 : i32
    %c0_i32_0 = arith.constant 0 : i32
    %c0_i32_1 = arith.constant 0 : i32
    return %c0_i32, %c0_i32_0 : i32, i32
  }
  func.func @transform_8(%arg0: i32) -> (i32, i32) {
    %c0_i32 = arith.constant 0 : i32
    %c0_i32_0 = arith.constant 0 : i32
    return %c0_i32, %arg0 : i32, i32
  }
}

</mosaic_0001>

<llo_original>
// kernel: tpu_custom_call.1
$region0: #{tpu_custom_call.1}
  #allocation0 [shape = 'u32[]', space=smem, size = 0x4, offset = 0x4, fixed_abs, tag = 'smem constant byte address 0x4 - core index']
  #allocation1 [shape = 'u32[72,128]{1,0:T(1,128)}', space=vmem, size = 0x9000, scoped, tag = 'internal scratch']
  #allocation2 [shape = 'f32[1]{0:T(128)S(6)}', space=smem, size = 0x200, scoped, tag = 'scoped memory for tpu_custom_call.1']
  %s0 = inlined_call_operand.<no memory space> [shape: f32[1], index: 0, kind: input, shape index: {}]
  %s1 = inlined_call_operand.vmem [shape: f32[4,2], index: 1, kind: input, shape index: {}]
  %s2 = inlined_call_operand.vmem [shape: f32[32,4], index: 2, kind: input, shape index: {}]
  %s3 = inlined_call_operand.vmem [shape: f32[32,32], index: 3, kind: input, shape index: {}]
  %s4 = inlined_call_operand.vmem [shape: f32[32,32], index: 4, kind: input, shape index: {}]
  %s5 = inlined_call_operand.vmem [shape: f32[4,32], index: 5, kind: input, shape index: {}]
  %s6 = inlined_call_operand.vmem [shape: f32[32,8], index: 6, kind: input, shape index: {}]
  %s7 = inlined_call_operand.vmem [shape: f32[4,1], index: 7, kind: input, shape index: {}]
  %s8 = inlined_call_operand.vmem [shape: f32[4,2], index: 8, kind: output, shape index: {}]
  %s9 = sld [smem:[#allocation0]]
  $region42: #{tpu_custom_call.1} parent=0
    _
  %s11 = ssub.s32 1, %s9
  %s12 = scalar_select 0, %s11, %s9
  %13 = sst [smem:[#allocation2]] %s0
  // Predicated region
  $region2: #{tpu_custom_call.1} parent=0 // pred_check
    _
  $region3: #{tpu_custom_call.1} parent=0 // pred_check_branch
    %15 = sbr.rel (0) target = $region5
  $region4: #{tpu_custom_call.1} parent=0 // pred_region
    _
  $region5: #{tpu_custom_call.1} parent=0 // pred_fallthru
    _
  // Predicated region
  $region6: #{tpu_custom_call.1} parent=0 // pred_check
    _
  $region7: #{tpu_custom_call.1} parent=0 // pred_check_branch
    %17 = sbr.rel (0) target = $region9
  $region8: #{tpu_custom_call.1} parent=0 // pred_region
    _
  $region9: #{tpu_custom_call.1} parent=0 // pred_fallthru
    _
  // Predicated region
  $region10: #{tpu_custom_call.1} parent=0 // pred_check
    _
  $region11: #{tpu_custom_call.1} parent=0 // pred_check_branch
    %19 = sbr.rel (0) target = $region13
  $region12: #{tpu_custom_call.1} parent=0 // pred_region
    _
  $region13: #{tpu_custom_call.1} parent=0 // pred_fallthru
    _
  // Predicated region
  $region14: #{tpu_custom_call.1} parent=0 // pred_check
    _
  $region15: #{tpu_custom_call.1} parent=0 // pred_check_branch
    %21 = sbr.rel (0) target = $region17
  $region16: #{tpu_custom_call.1} parent=0 // pred_region
    _
  $region17: #{tpu_custom_call.1} parent=0 // pred_fallthru
    _
  // Predicated region
  $region18: #{tpu_custom_call.1} parent=0 // pred_check
    _
  $region19: #{tpu_custom_call.1} parent=0 // pred_check_branch
    %23 = sbr.rel (0) target = $region21
  $region20: #{tpu_custom_call.1} parent=0 // pred_region
    _
  $region21: #{tpu_custom_call.1} parent=0 // pred_fallthru
    _
  // Predicated region
  $region22: #{tpu_custom_call.1} parent=0 // pred_check
    _
  $region23: #{tpu_custom_call.1} parent=0 // pred_check_branch
    %25 = sbr.rel (0) target = $region25
  $region24: #{tpu_custom_call.1} parent=0 // pred_region
    _
  $region25: #{tpu_custom_call.1} parent=0 // pred_fallthru
    _
  // Predicated region
  $region26: #{tpu_custom_call.1} parent=0 // pred_check
    _
  $region27: #{tpu_custom_call.1} parent=0 // pred_check_branch
    %27 = sbr.rel (0) target = $region29
  $region28: #{tpu_custom_call.1} parent=0 // pred_region
    _
  $region29: #{tpu_custom_call.1} parent=0 // pred_fallthru
    _
  // Predicated region
  $region30: #{tpu_custom_call.1} parent=0 // pred_check
    _
  $region31: #{tpu_custom_call.1} parent=0 // pred_check_branch
    %29 = sbr.rel (0) target = $region33
  $region32: #{tpu_custom_call.1} parent=0 // pred_region
    _
  $region33: #{tpu_custom_call.1} parent=0 // pred_fallthru
    _
  %s30 = sld [smem:[#allocation2]]
  %v31 = vstv %s30
  %v32 = vld [vmem:[%s1] sm:$0xf]
  %v33 = vld [vmem:[%s2] sm:$0xff]
  %v34 = vld [vmem:[%s2 + $0x8] sm:$0xff]
  %v35 = vld [vmem:[%s2 + $0x10] sm:$0xff]
  %v36 = vld [vmem:[%s2 + $0x18] sm:$0xff]
  %v37 = vld [vmem:[%s3] sm:$0xff]
  %v38 = vld [vmem:[%s3 + $0x8] sm:$0xff]
  %v39 = vld [vmem:[%s3 + $0x10] sm:$0xff]
  %v40 = vld [vmem:[%s3 + $0x18] sm:$0xff]
  %v41 = vld [vmem:[%s4] sm:$0xff]
  %v42 = vld [vmem:[%s4 + $0x8] sm:$0xff]
  %v43 = vld [vmem:[%s4 + $0x10] sm:$0xff]
  %v44 = vld [vmem:[%s4 + $0x18] sm:$0xff]
  %v45 = vld [vmem:[%s5] sm:$0xf]
  %v46 = vld [vmem:[%s6] sm:$0xff]
  %v47 = vld [vmem:[%s6 + $0x8] sm:$0xff]
  %v48 = vld [vmem:[%s6 + $0x10] sm:$0xff]
  %v49 = vld [vmem:[%s6 + $0x18] sm:$0xff]
  %v50 = vld [vmem:[%s7] sm:$0xf]
  %v51 = vand.u32 2147483647, %v31
  %vm52 = vcmp.le.f32.partialorder %v51, 0.7853982
  %vm53 = vcmp.lt.s32.totalorder %v31, 0
  %v54 = vand.u32 %v31, 2139095040
  %v55 = vshrl.u32 %v54, 23
  %v56 = vsub.s32 %v55, 127
  %v57 = vand.u32 2147483647, %v31
  %v58 = vand.u32 %v57, 8388607
  %v59 = vor.u32 %v58, 8388608
  %v60 = vsub.s32 0, %v59
  %v61 = vadd.s32 %v56, 1
  %vm62 = vcmp.gt.s32.totalorder %v61, 0
  %v63 = vsel %vm62, %v61, 0
  %v64 = vshrl.u32 %v63, 5
  %v65 = vand.u32 %v63, 31
  %v66 = vsub.s32 32, %v65
  %v67 = vshrl.u32 683565275, %v66
  %v68 = vshll.u32 683565275, %v65
  %v69 = vshrl.u32 2475754826, %v66
  %v70 = vor.u32 %v68, %v69
  %v71 = vshll.u32 2475754826, %v65
  %v72 = vshrl.u32 2131351028, %v66
  %v73 = vor.u32 %v71, %v72
  %v74 = vshll.u32 2131351028, %v65
  %v75 = vshrl.u32 2102212464, %v66
  %v76 = vor.u32 %v74, %v75
  %v77 = vshll.u32 2102212464, %v65
  %v78 = vshrl.u32 920167782, %v66
  %v79 = vor.u32 %v77, %v78
  %v80 = vshll.u32 920167782, %v65
  %v81 = vshrl.u32 1326507024, %v66
  %v82 = vor.u32 %v80, %v81
  %vm83 = vcmp.lt.s32.totalorder %v64, 1
  %vm84 = vcmp.lt.s32.totalorder %v64, 2
  %vm85 = vcmp.lt.s32.totalorder %v64, 3
  %vm86 = vcmp.lt.s32.totalorder %v64, 4
  %v87 = vsel %vm83, %v67, %v70
  %v88 = vsel %vm86, %v76, 2102212464
  %v89 = vsel %vm85, %v73, %v88
  %v90 = vsel %vm84, %v87, %v89
  %v91 = vsel %vm83, %v70, %v73
  %v92 = vsel %vm86, %v79, 920167782
  %v93 = vsel %vm85, %v76, %v92
  %v94 = vsel %vm84, %v91, %v93
  %v95 = vsel %vm83, %v73, %v76
  %v96 = vsel %vm86, %v82, 1326507024
  %v97 = vsel %vm85, %v79, %v96
  %v98 = vsel %vm84, %v95, %v97
  %v99 = vshll.u32 %v59, 8
  %v100 = vand.u32 %v99, 65535
  %v101 = vshrl.u32 %v99, 16
  %v102 = vand.u32 %v98, 65535
  %v103 = vshrl.u32 %v98, 16
  %v104 = vmul.u32 %v100, %v102
  %v105 = vmul.u32 %v100, %v103
  %v106 = vmul.u32 %v101, %v102
  %v107 = vmul.u32 %v101, %v103
  %v108 = vshll.u32 %v105, 16
  %v109 = vshrl.u32 %v105, 16
  %v110 = vshll.u32 %v106, 16
  %v111 = vshrl.u32 %v106, 16
  %vm112 = vc.u32 %v104, %v108
  %v113 = vsel %vm112, 1, 0
  %v114 = vadd.s32 %v104, %v108
  %v115 = vadd.s32 %v107, %v113
  %vm116 = vc.u32 %v114, %v110
  %v117 = vsel %vm116, 1, 0
  %v118 = vadd.s32 %v114, %v110
  %v119 = vadd.s32 %v115, %v117
  %v120 = vadd.s32 %v119, %v109
  %v121 = vadd.s32 %v120, %v111
  %v122 = vand.u32 %v99, 65535
  %v123 = vshrl.u32 %v99, 16
  %v124 = vand.u32 %v94, 65535
  %v125 = vshrl.u32 %v94, 16
  %v126 = vmul.u32 %v122, %v124
  %v127 = vmul.u32 %v122, %v125
  %v128 = vmul.u32 %v123, %v124
  %v129 = vmul.u32 %v123, %v125
  %v130 = vshll.u32 %v127, 16
  %v131 = vshrl.u32 %v127, 16
  %v132 = vshll.u32 %v128, 16
  %v133 = vshrl.u32 %v128, 16
  %vm134 = vc.u32 %v126, %v130
  %v135 = vsel %vm134, 1, 0
  %v136 = vadd.s32 %v126, %v130
  %v137 = vadd.s32 %v129, %v135
  %vm138 = vc.u32 %v136, %v132
  %v139 = vsel %vm138, 1, 0
  %v140 = vadd.s32 %v136, %v132
  %v141 = vadd.s32 %v137, %v139
  %v142 = vadd.s32 %v141, %v131
  %v143 = vadd.s32 %v142, %v133
  %v144 = vmul.u32 %v99, %v90
  %v145 = vadd.s32 %v121, %v140
  %vm146 = vc.u32 %v121, %v140
  %v147 = vadd.s32 %v143, 1
  %v148 = vsel %vm146, %v147, %v143
  %v149 = vadd.s32 %v144, %v148
  %v150 = vadd.s32 %v149, 536870912
  %v151 = vshrl.u32 %v150, 30
  %v152 = vshll.u32 %v151, 30
  %v153 = vsub.s32 %v149, %v152
  %vm154 = vcmp.lt.s32.totalorder %v153, 0
  %v155 = vsub.s32 0, %v153
  %v156 = vsel %vm154, %v155, %v153
  %v157 = vclz %v156
  %v158 = vsub.s32 %v157, 2
  %vm159 = vcmp.gt.s32.totalorder 0, %v158
  %v160 = vsel %vm159, 0, %v158
  %v161 = vsub.s32 32, %v160
  %v162 = vshll.u32 %v153, %v160
  %v163 = vshrl.u32 %v145, %v161
  %v164 = vor.u32 %v162, %v163
  %v165 = vsub.s32 4294967266, %v160
  %v166 = vadd.s32 %v165, 127
  %v167 = vshll.u32 %v166, 23
  %v168 = vor.u32 4788187, %v167
  %v169 = vand.u32 2147483647, %v168
  %v171 = vcvt.s32.f32 %v164
  %v172 = vmul.f32 %v171, %v169
  %v173 = vxor.u32 %v172, 2147483648
  %v174 = vsel %vm53, %v173, %v172
  %v175 = vsub.s32 4, %v151
  %v176 = vsel %vm53, %v175, %v151
  %v177 = vsel %vm52, %v31, %v174
  %v178 = vsel %vm52, 0, %v176
  %v179 = vmul.f32 %v177, %v177
  %v180 = vmul.f32 %v179, -0.001358992
  %v181 = vadd.f32 %v180, 0.041655596
  %v182 = vmul.f32 %v179, %v181
  %v183 = vadd.f32 %v182, -0.4999988
  %v184 = vmul.f32 %v179, %v183
  %v185 = vadd.f32 1.0, %v184
  %v186 = vmul.f32 %v177, %v177
  %v187 = vmul.f32 %v186, -0.00019511016
  %v188 = vadd.f32 %v187, 0.008332121
  %v189 = vmul.f32 %v186, %v188
  %v190 = vadd.f32 %v189, -0.16666654
  %v191 = vmul.f32 %v186, %v190
  %v192 = vadd.f32 %v191, 1.0
  %v193 = vmul.f32 %v192, %v177
  %vm194 = vweird.f32 %v31
  %v195 = vadd.s32 %v178, 3
  %v196 = vand.u32 %v195, 3
  %vm197 = vcmp.lt.s32.totalorder %v196, 2
  %vm198 = vcmp.eq.s32.totalorder %v196, 0
  %v199 = vxor.u32 %v193, 2147483648
  %v200 = vsel %vm198, %v185, %v199
  %vm201 = vcmp.eq.s32.totalorder %v196, 2
  %v202 = vxor.u32 %v185, 2147483648
  %v203 = vsel %vm201, %v202, %v193
  %v204 = vsel %vm197, %v200, %v203
  %v205 = vsel %vm194, nan, %v204
  %v206 = vand.u32 2147483647, %v31
  %vm207 = vcmp.le.f32.partialorder %v206, 0.7853982
  %vm208 = vcmp.lt.s32.totalorder %v31, 0
  %v209 = vand.u32 %v31, 2139095040
  %v210 = vshrl.u32 %v209, 23
  %v211 = vsub.s32 %v210, 127
  %v212 = vand.u32 2147483647, %v31
  %v213 = vand.u32 %v212, 8388607
  %v214 = vor.u32 %v213, 8388608
  %v215 = vsub.s32 0, %v214
  %v216 = vadd.s32 %v211, 1
  %vm217 = vcmp.gt.s32.totalorder %v216, 0
  %v218 = vsel %vm217, %v216, 0
  %v219 = vshrl.u32 %v218, 5
  %v220 = vand.u32 %v218, 31
  %v221 = vsub.s32 32, %v220
  %v222 = vshrl.u32 683565275, %v221
  %v223 = vshll.u32 683565275, %v220
  %v224 = vshrl.u32 2475754826, %v221
  %v225 = vor.u32 %v223, %v224
  %v226 = vshll.u32 2475754826, %v220
  %v227 = vshrl.u32 2131351028, %v221
  %v228 = vor.u32 %v226, %v227
  %v229 = vshll.u32 2131351028, %v220
  %v230 = vshrl.u32 2102212464, %v221
  %v231 = vor.u32 %v229, %v230
  %v232 = vshll.u32 2102212464, %v220
  %v233 = vshrl.u32 920167782, %v221
  %v234 = vor.u32 %v232, %v233
  %v235 = vshll.u32 920167782, %v220
  %v236 = vshrl.u32 1326507024, %v221
  %v237 = vor.u32 %v235, %v236
  %vm238 = vcmp.lt.s32.totalorder %v219, 1
  %vm239 = vcmp.lt.s32.totalorder %v219, 2
  %vm240 = vcmp.lt.s32.totalorder %v219, 3
  %vm241 = vcmp.lt.s32.totalorder %v219, 4
  %v242 = vsel %vm238, %v222, %v225
  %v243 = vsel %vm241, %v231, 2102212464
  %v244 = vsel %vm240, %v228, %v243
  %v245 = vsel %vm239, %v242, %v244
  %v246 = vsel %vm238, %v225, %v228
  %v247 = vsel %vm241, %v234, 920167782
  %v248 = vsel %vm240, %v231, %v247
  %v249 = vsel %vm239, %v246, %v248
  %v250 = vsel %vm238, %v228, %v231
  %v251 = vsel %vm241, %v237, 1326507024
  %v252 = vsel %vm240, %v234, %v251
  %v253 = vsel %vm239, %v250, %v252
  %v254 = vshll.u32 %v214, 8
  %v255 = vand.u32 %v254, 65535
  %v256 = vshrl.u32 %v254, 16
  %v257 = vand.u32 %v253, 65535
  %v258 = vshrl.u32 %v253, 16
  %v259 = vmul.u32 %v255, %v257
  %v260 = vmul.u32 %v255, %v258
  %v261 = vmul.u32 %v256, %v257
  %v262 = vmul.u32 %v256, %v258
  %v263 = vshll.u32 %v260, 16
  %v264 = vshrl.u32 %v260, 16
  %v265 = vshll.u32 %v261, 16
  %v266 = vshrl.u32 %v261, 16
  %vm267 = vc.u32 %v259, %v263
  %v268 = vsel %vm267, 1, 0
  %v269 = vadd.s32 %v259, %v263
  %v270 = vadd.s32 %v262, %v268
  %vm271 = vc.u32 %v269, %v265
  %v272 = vsel %vm271, 1, 0
  %v273 = vadd.s32 %v269, %v265
  %v274 = vadd.s32 %v270, %v272
  %v275 = vadd.s32 %v274, %v264
  %v276 = vadd.s32 %v275, %v266
  %v277 = vand.u32 %v254, 65535
  %v278 = vshrl.u32 %v254, 16
  %v279 = vand.u32 %v249, 65535
  %v280 = vshrl.u32 %v249, 16
  %v281 = vmul.u32 %v277, %v279
  %v282 = vmul.u32 %v277, %v280
  %v283 = vmul.u32 %v278, %v279
  %v284 = vmul.u32 %v278, %v280
  %v285 = vshll.u32 %v282, 16
  %v286 = vshrl.u32 %v282, 16
  %v287 = vshll.u32 %v283, 16
  %v288 = vshrl.u32 %v283, 16
  %vm289 = vc.u32 %v281, %v285
  %v290 = vsel %vm289, 1, 0
  %v291 = vadd.s32 %v281, %v285
  %v292 = vadd.s32 %v284, %v290
  %vm293 = vc.u32 %v291, %v287
  %v294 = vsel %vm293, 1, 0
  %v295 = vadd.s32 %v291, %v287
  %v296 = vadd.s32 %v292, %v294
  %v297 = vadd.s32 %v296, %v286
  %v298 = vadd.s32 %v297, %v288
  %v299 = vmul.u32 %v254, %v245
  %v300 = vadd.s32 %v276, %v295
  %vm301 = vc.u32 %v276, %v295
  %v302 = vadd.s32 %v298, 1
  %v303 = vsel %vm301, %v302, %v298
  %v304 = vadd.s32 %v299, %v303
  %v305 = vadd.s32 %v304, 536870912
  %v306 = vshrl.u32 %v305, 30
  %v307 = vshll.u32 %v306, 30
  %v308 = vsub.s32 %v304, %v307
  %vm309 = vcmp.lt.s32.totalorder %v308, 0
  %v310 = vsub.s32 0, %v308
  %v311 = vsel %vm309, %v310, %v308
  %v312 = vclz %v311
  %v313 = vsub.s32 %v312, 2
  %vm314 = vcmp.gt.s32.totalorder 0, %v313
  %v315 = vsel %vm314, 0, %v313
  %v316 = vsub.s32 32, %v315
  %v317 = vshll.u32 %v308, %v315
  %v318 = vshrl.u32 %v300, %v316
  %v319 = vor.u32 %v317, %v318
  %v320 = vsub.s32 4294967266, %v315
  %v321 = vadd.s32 %v320, 127
  %v322 = vshll.u32 %v321, 23
  %v323 = vor.u32 4788187, %v322
  %v324 = vand.u32 2147483647, %v323
  %v326 = vcvt.s32.f32 %v319
  %v327 = vmul.f32 %v326, %v324
  %v328 = vxor.u32 %v327, 2147483648
  %v329 = vsel %vm208, %v328, %v327
  %v330 = vsub.s32 4, %v306
  %v331 = vsel %vm208, %v330, %v306
  %v332 = vsel %vm207, %v31, %v329
  %v333 = vsel %vm207, 0, %v331
  %v334 = vmul.f32 %v332, %v332
  %v335 = vmul.f32 %v334, -0.001358992
  %v336 = vadd.f32 %v335, 0.041655596
  %v337 = vmul.f32 %v334, %v336
  %v338 = vadd.f32 %v337, -0.4999988
  %v339 = vmul.f32 %v334, %v338
  %v340 = vadd.f32 1.0, %v339
  %v341 = vmul.f32 %v332, %v332
  %v342 = vmul.f32 %v341, -0.00019511016
  %v343 = vadd.f32 %v342, 0.008332121
  %v344 = vmul.f32 %v341, %v343
  %v345 = vadd.f32 %v344, -0.16666654
  %v346 = vmul.f32 %v341, %v345
  %v347 = vadd.f32 %v346, 1.0
  %v348 = vmul.f32 %v347, %v332
  %vm349 = vweird.f32 %v31
  %v350 = vand.u32 %v333, 3
  %vm351 = vcmp.lt.s32.totalorder %v350, 2
  %vm352 = vcmp.eq.s32.totalorder %v350, 0
  %v353 = vxor.u32 %v348, 2147483648
  %v354 = vsel %vm352, %v340, %v353
  %vm355 = vcmp.eq.s32.totalorder %v350, 2
  %v356 = vxor.u32 %v340, 2147483648
  %v357 = vsel %vm355, %v356, %v348
  %v358 = vsel %vm351, %v354, %v357
  %v359 = vsel %vm349, nan, %v358
  %v360 = vmul.f32 %v31, %v46
  %v361 = vmul.f32 %v31, %v47
  %v362 = vmul.f32 %v31, %v48
  %v363 = vmul.f32 %v31, %v49
  %v364 = vmul.f32 %v205, %v46
  %v365 = vmul.f32 %v205, %v47
  %v366 = vmul.f32 %v205, %v48
  %v367 = vmul.f32 %v205, %v49
  %372 = vrot.lane.b32.xlu0 %v364, 127
  %v373 = vpop.permute.xlu0 %372
  %374 = vrot.lane.b32.xlu0 %v365, 127
  %v375 = vpop.permute.xlu0 %374
  %376 = vrot.lane.b32.xlu0 %v366, 127
  %v377 = vpop.permute.xlu0 %376
  %378 = vrot.lane.b32.xlu0 %v367, 127
  %v379 = vpop.permute.xlu0 %378
  %v384 = vadd.f32 %v360, %v373
  %v385 = vadd.f32 %v361, %v375
  %v386 = vadd.f32 %v362, %v377
  %v387 = vadd.f32 %v363, %v379
  %v388 = vmul.f32 %v359, %v46
  %v389 = vmul.f32 %v359, %v47
  %v390 = vmul.f32 %v359, %v48
  %v391 = vmul.f32 %v359, %v49
  %396 = vrot.lane.b32.xlu0 %v388, 126
  %v397 = vpop.permute.xlu0 %396
  %398 = vrot.lane.b32.xlu0 %v389, 126
  %v399 = vpop.permute.xlu0 %398
  %400 = vrot.lane.b32.xlu0 %v390, 126
  %v401 = vpop.permute.xlu0 %400
  %402 = vrot.lane.b32.xlu0 %v391, 126
  %v403 = vpop.permute.xlu0 %402
  %v408 = vadd.f32 %v384, %v397
  %v409 = vadd.f32 %v385, %v399
  %v410 = vadd.f32 %v386, %v401
  %v411 = vadd.f32 %v387, %v403
  %416 = vrot.lane.b32.xlu0 %v46, 125
  %v417 = vpop.permute.xlu0 %416
  %418 = vrot.lane.b32.xlu0 %v47, 125
  %v419 = vpop.permute.xlu0 %418
  %420 = vrot.lane.b32.xlu0 %v48, 125
  %v421 = vpop.permute.xlu0 %420
  %422 = vrot.lane.b32.xlu0 %v49, 125
  %v423 = vpop.permute.xlu0 %422
  %v428 = vadd.f32 %v408, %v417
  %v429 = vadd.f32 %v409, %v419
  %v430 = vadd.f32 %v410, %v421
  %v431 = vadd.f32 %v411, %v423
  %433 = vset.pattern.permute.xlu0 0
  %434 = vperm.xlu0 %433, %v428
  %v435 = vpop.permute.xlu0 %434
  %438 = vset.pattern.permute.xlu0 0
  %439 = vperm.xlu0 %438, %v429
  %v440 = vpop.permute.xlu0 %439
  %443 = vset.pattern.permute.xlu0 0
  %444 = vperm.xlu0 %443, %v430
  %v445 = vpop.permute.xlu0 %444
  %448 = vset.pattern.permute.xlu0 0
  %449 = vperm.xlu0 %448, %v431
  %v450 = vpop.permute.xlu0 %449
  %vm452 = vcmask 31744
  %v454 = vsel %vm452, %v33, 0
  %v457 = vsel %vm452, %v34, 0
  %v460 = vsel %vm452, %v35, 0
  %v463 = vsel %vm452, %v36, 0
  %vm465 = vcmask 1043456
  %v467 = vsel %vm465, %v32, 0
  %469 = vmatpush.msra.mxu0 0.0
  %470 = vmatpush.msra.mxu0 0.0
  %471 = vmatpush.msra.mxu0 0.0
  %472 = vmatpush.msra.mxu0 0.0
  %473 = vmatpush.msra.mxu0 0.0
  %474 = vmatpush.msra.mxu0 0.0
  %475 = vmatpush.msra.mxu0 0.0
  %476 = vmatpush.msra.mxu0 0.0
  %477 = vmatpush.msra.mxu0 0.0
  %478 = vmatpush.msra.mxu0 0.0
  %479 = vmatpush.msra.mxu0 0.0
  %480 = vmatpush.msra.mxu0 0.0
  %481 = vmatpush.msra.mxu0 0.0
  %482 = vmatpush.msra.mxu0 0.0
  %483 = vmatpush.msra.mxu0 0.0
  %484 = vmatpush.msra.mxu0 %v467
  %485 = vmatmul.f32.gmra.mxu0 %v454
  %v486 = vpop.f32.mrf.mxu0
  %v487 = vadd.f32 %v435, %v486
  %488 = vmatmul.f32.gmra.mxu0 %v457
  %v489 = vpop.f32.mrf.mxu0
  %v490 = vadd.f32 %v440, %v489
  %491 = vmatmul.f32.gmra.mxu0 %v460
  %v492 = vpop.f32.mrf.mxu0
  %v493 = vadd.f32 %v445, %v492
  %494 = vmatmul.f32.gmra.mxu0 %v463
  %v495 = vpop.f32.mrf.mxu0
  %v496 = vadd.f32 %v450, %v495
  %497 = vdwg.mxu0
  %v498 = vmax.f32 %v487, 0.0
  %v499 = vmax.f32 %v490, 0.0
  %v500 = vmax.f32 %v493, 0.0
  %v501 = vmax.f32 %v496, 0.0
  %502 = vset.pattern.permute.xlu0 4
  %503 = vperm.xlu0 %502, %v46
  %v504 = vpop.permute.xlu0 %503
  %506 = vset.pattern.permute.xlu0 4
  %507 = vperm.xlu0 %506, %v47
  %v508 = vpop.permute.xlu0 %507
  %510 = vset.pattern.permute.xlu0 4
  %511 = vperm.xlu0 %510, %v48
  %v512 = vpop.permute.xlu0 %511
  %514 = vset.pattern.permute.xlu0 4
  %515 = vperm.xlu0 %514, %v49
  %v516 = vpop.permute.xlu0 %515
  %vm518 = vcmask 261120
  %v520 = vsel %vm518, %v37, 0
  %v523 = vsel %vm518, %v38, 0
  %v526 = vsel %vm518, %v39, 0
  %v529 = vsel %vm518, %v40, 0
  %531 = vmatpush.msra.mxu0 0.0
  %532 = vmatpush.msra.mxu0 0.0
  %533 = vmatpush.msra.mxu0 0.0
  %534 = vmatpush.msra.mxu0 0.0
  %535 = vmatpush.msra.mxu0 0.0
  %536 = vmatpush.msra.mxu0 0.0
  %537 = vmatpush.msra.mxu0 0.0
  %538 = vmatpush.msra.mxu0 0.0
  %539 = vmatpush.msra.mxu0 0.0
  %540 = vmatpush.msra.mxu0 0.0
  %541 = vmatpush.msra.mxu0 0.0
  %542 = vmatpush.msra.mxu0 0.0
  %543 = vmatpush.msra.mxu0 %v501
  %544 = vmatpush.msra.mxu0 %v500
  %545 = vmatpush.msra.mxu0 %v499
  %546 = vmatpush.msra.mxu0 %v498
  %547 = vmatmul.f32.gmra.mxu0 %v520
  %v548 = vpop.f32.mrf.mxu0
  %v549 = vadd.f32 %v504, %v548
  %550 = vmatmul.f32.gmra.mxu0 %v523
  %v551 = vpop.f32.mrf.mxu0
  %v552 = vadd.f32 %v508, %v551
  %553 = vmatmul.f32.gmra.mxu0 %v526
  %v554 = vpop.f32.mrf.mxu0
  %v555 = vadd.f32 %v512, %v554
  %556 = vmatmul.f32.gmra.mxu0 %v529
  %v557 = vpop.f32.mrf.mxu0
  %v558 = vadd.f32 %v516, %v557
  %559 = vdwg.mxu0
  %v560 = vmax.f32 %v549, 0.0
  %v561 = vmax.f32 %v552, 0.0
  %v562 = vmax.f32 %v555, 0.0
  %v563 = vmax.f32 %v558, 0.0
  %564 = vset.pattern.permute.xlu0 5
  %565 = vperm.xlu0 %564, %v46
  %v566 = vpop.permute.xlu0 %565
  %568 = vset.pattern.permute.xlu0 5
  %569 = vperm.xlu0 %568, %v47
  %v570 = vpop.permute.xlu0 %569
  %572 = vset.pattern.permute.xlu0 5
  %573 = vperm.xlu0 %572, %v48
  %v574 = vpop.permute.xlu0 %573
  %576 = vset.pattern.permute.xlu0 5
  %577 = vperm.xlu0 %576, %v49
  %v578 = vpop.permute.xlu0 %577
  %v581 = vsel %vm518, %v41, 0
  %v584 = vsel %vm518, %v42, 0
  %v587 = vsel %vm518, %v43, 0
  %v590 = vsel %vm518, %v44, 0
  %592 = vmatpush.msra.mxu0 0.0
  %593 = vmatpush.msra.mxu0 0.0
  %594 = vmatpush.msra.mxu0 0.0
  %595 = vmatpush.msra.mxu0 0.0
  %596 = vmatpush.msra.mxu0 0.0
  %597 = vmatpush.msra.mxu0 0.0
  %598 = vmatpush.msra.mxu0 0.0
  %599 = vmatpush.msra.mxu0 0.0
  %600 = vmatpush.msra.mxu0 0.0
  %601 = vmatpush.msra.mxu0 0.0
  %602 = vmatpush.msra.mxu0 0.0
  %603 = vmatpush.msra.mxu0 0.0
  %604 = vmatpush.msra.mxu0 %v563
  %605 = vmatpush.msra.mxu0 %v562
  %606 = vmatpush.msra.mxu0 %v561
  %607 = vmatpush.msra.mxu0 %v560
  %608 = vmatmul.f32.gmra.mxu0 %v581
  %v609 = vpop.f32.mrf.mxu0
  %v610 = vadd.f32 %v566, %v609
  %611 = vmatmul.f32.gmra.mxu0 %v584
  %v612 = vpop.f32.mrf.mxu0
  %v613 = vadd.f32 %v570, %v612
  %614 = vmatmul.f32.gmra.mxu0 %v587
  %v615 = vpop.f32.mrf.mxu0
  %v616 = vadd.f32 %v574, %v615
  %617 = vmatmul.f32.gmra.mxu0 %v590
  %v618 = vpop.f32.mrf.mxu0
  %v619 = vadd.f32 %v578, %v618
  %620 = vdwg.mxu0
  %v621 = vmax.f32 %v610, 0.0
  %v622 = vmax.f32 %v613, 0.0
  %v623 = vmax.f32 %v616, 0.0
  %v624 = vmax.f32 %v619, 0.0
  %626 = vset.pattern.permute.xlu0 0
  %627 = vperm.xlu0 %626, %v50
  %v628 = vpop.permute.xlu0 %627
  %v631 = vsel %vm518, %v45, 0
  %633 = vmatpush.msra.mxu0 0.0
  %634 = vmatpush.msra.mxu0 0.0
  %635 = vmatpush.msra.mxu0 0.0
  %636 = vmatpush.msra.mxu0 0.0
  %637 = vmatpush.msra.mxu0 0.0
  %638 = vmatpush.msra.mxu0 0.0
  %639 = vmatpush.msra.mxu0 0.0
  %640 = vmatpush.msra.mxu0 0.0
  %641 = vmatpush.msra.mxu0 0.0
  %642 = vmatpush.msra.mxu0 0.0
  %643 = vmatpush.msra.mxu0 0.0
  %644 = vmatpush.msra.mxu0 0.0
  %645 = vmatpush.msra.mxu0 %v624
  %646 = vmatpush.msra.mxu0 %v623
  %647 = vmatpush.msra.mxu0 %v622
  %648 = vmatpush.msra.mxu0 %v621
  %649 = vmatmul.f32.gmra.mxu0 %v631
  %v650 = vpop.f32.mrf.mxu0
  %v651 = vadd.f32 %v628, %v650
  %652 = vdwg.mxu0
  %v653 = vmul.f32 %v651, %v651
  %vm654 = vcmask 11264
  %v655 = vsel %vm654, %v653, 0.0
  %v656 = vrot.slane %v655, 4
  %v657 = vadd.f32 %v655, %v656
  %v658 = vrot.slane %v657, 2
  %v659 = vadd.f32 %v657, %v658
  %v660 = vrot.slane %v659, 1
  %v661 = vadd.f32 %v659, %v660
  %v662 = vadd.f32 %v661, 1e-12
  %v663 = vrsqrt.pop %v662
  %v664 = vmul.f32 %v663, %v662
  %v665 = vmul.f32 %v664, %v663
  %v666 = vmul.f32 0.5, %v665
  %v667 = vsub.f32 1.5, %v666
  %v668 = vmul.f32 %v663, %v667
  %vm669 = vweird.f32 %v662
  %vm670 = vweird.f32 %v663
  %vm671 = vmor %vm669, %vm670
  %v672 = vsel %vm671, %v663, %v668
  %v673 = vmul.f32 %v672, 5.0
  %v674 = vmin.f32 %v673, 1.0
  %v675 = vmul.f32 %v651, %v674
  %676 = vst.msk [vmem:[%s8] sm:$0xf] %vm654, %v675
  // Predicated region
  $region34: #{tpu_custom_call.1} parent=0 // pred_check
    _
  $region35: #{tpu_custom_call.1} parent=0 // pred_check_branch
    %678 = sbr.rel (0) target = $region37
  $region36: #{tpu_custom_call.1} parent=0 // pred_region
    _
  $region37: #{tpu_custom_call.1} parent=0 // pred_fallthru
    _
  // Predicated region
  $region38: #{tpu_custom_call.1} parent=0 // pred_check
    _
  $region39: #{tpu_custom_call.1} parent=0 // pred_check_branch
    %680 = sbr.rel (0) target = $region41
  $region40: #{tpu_custom_call.1} parent=0 // pred_region
    _
  $region41: #{tpu_custom_call.1} parent=0 // pred_fallthru
    _

</llo_original>
